<compile_context>
chip_gen: v7x
topology: tpu7x:2x2x1
jax: 0.10.0
libtpu: 0.0.40
codegen_flags: <defaults>
</compile_context>

<pallas_src>
import functools

import jax
import jax.numpy as jnp
import numpy as np
from jax.experimental import pallas as pl
from jax.experimental.pallas import tpu as pltpu


def _nb1d_kernel(x_ref, w_ref, b_ref, out_sum_ref, out_ref, *,
                 H, W, dil, compute_dtype):
    """One grid step: a (Cp, L) slab where L is one or more whole images."""
    HW = H * W
    x = x_ref[0]                                     # (Cp, L) f32
    Cp, L = x.shape

    # Within-image flat position / column position along the lane axis.
    pos = jax.lax.broadcasted_iota(jnp.int32, (1, L), 1) % HW
    wpos = pos % W

    def stack3(a, s, lo_mask, hi_mask):
        """K-stacked conv operand (3Cp, L) from activation a (Cp, L).

        rows [0:Cp)    : a shifted so position p holds a[p - s] (tap t=0)
        rows [Cp:2Cp)  : a                                      (tap t=1)
        rows [2Cp:3Cp) : a shifted so position p holds a[p + s] (tap t=2)
        Out-of-image / out-of-row taps are masked to zero (== zero padding).
        pltpu.roll(v, k, axis=1)[p] == v[(p - k) mod L].
        """
        zero = jnp.zeros_like(a)
        lo = jnp.where(lo_mask, pltpu.roll(a, s % L, axis=1), zero)
        hi = jnp.where(hi_mask, pltpu.roll(a, (-s) % L, axis=1), zero)
        return jnp.concatenate([lo, a, hi], axis=0)          # (3Cp, L)

    def conv(a, idx, s, lo_mask, hi_mask):
        k = stack3(a, s, lo_mask, hi_mask)                   # (3Cp, L) compute_dtype
        y = jnp.dot(w_ref[idx], k,
                    preferred_element_type=jnp.float32)      # (Cp, L) f32, K = 3Cp
        return y + b_ref[idx]                                # f32 bias add

    relu = lambda v: jnp.maximum(v, 0)

    sh1, sh2 = W, 1              # shifts for the dilation-1 conv pair
    sh3, sh4 = dil * W, dil      # shifts for the dilated conv pair

    a0 = x.astype(compute_dtype)
    o = relu(conv(a0, 0, sh1, pos >= sh1, pos < HW - sh1)).astype(compute_dtype)   # conv3x1_1 + relu
    o = relu(conv(o, 1, sh2, wpos >= sh2, wpos < W - sh2)).astype(compute_dtype)   # conv1x3_1 (+bn1) + relu
    o = relu(conv(o, 2, sh3, pos >= sh3, pos < HW - sh3)).astype(compute_dtype)    # conv3x1_2 + relu
    o = conv(o, 3, sh4, wpos >= sh4, wpos < W - sh4)                               # conv1x3_2 (+bn2), f32
    # TODO(synk): train-mode Dropout2d (stochastic channel drop) not implemented;
    # dropprob=0 / eval mode => identity, matching the PyTorch module's skip.

    out_ref[0] = o.astype(out_ref.dtype)
    out_sum_ref[0] = relu(o + x).astype(out_sum_ref.dtype)


def non_bottleneck_1d_forward(x_nchw, params, dilated, *,
                              compute_dtype=jnp.bfloat16,
                              lane_batch=None,
                              vmem_limit_bytes=64 * 1024 * 1024):
    N, C, H, W = x_nchw.shape
    HW = H * W

    # Pad channels to the sublane packing of the compute dtype so every
    # concat / slab inside the kernel is tile-aligned.
    pack = 16 if jnp.dtype(compute_dtype).itemsize < 4 else 8
    Cp = ((C + pack - 1) // pack) * pack

    def pad_vec(v):
        return jnp.pad(v, (0, Cp - C))

    def stack_taps(w, along_h):
        # PyTorch Conv2d weight (Cout, Cin, kh, kw) -> (Cp, 3Cp): the three
        # taps (t=0,1,2) stacked along the contraction (K) axis.
        taps = []
        for t in range(3):
            wt = w[:, :, t, 0] if along_h else w[:, :, 0, t]      # (C, C)
            taps.append(jnp.pad(wt, ((0, Cp - C), (0, Cp - C))))  # (Cp, Cp)
        return jnp.concatenate(taps, axis=1)                      # (Cp, 3Cp)

    def bn_fold(g, b, m, v, eps=1e-3):   # matches nn.BatchNorm2d(eps=0.001)
        s = g / jnp.sqrt(v + eps)
        return s, b - m * s

    sc1, t1 = bn_fold(params["g1"], params["be1"], params["m1"], params["v1"])
    sc2, t2 = bn_fold(params["g2"], params["be2"], params["m2"], params["v2"])

    # Fold each BN scale into the conv that precedes it (per output channel).
    w1 = stack_taps(params["w1"], True)
    w2 = stack_taps(params["w2"], False) * pad_vec(sc1)[:, None]
    w3 = stack_taps(params["w3"], True)
    w4 = stack_taps(params["w4"], False) * pad_vec(sc2)[:, None]
    b1 = pad_vec(params["b1"])
    b2 = pad_vec(sc1 * params["b2"] + t1)
    b3 = pad_vec(params["b3"])
    b4 = pad_vec(sc2 * params["b4"] + t2)

    w_all = jnp.stack([w1, w2, w3, w4], axis=0).astype(compute_dtype)  # (4, Cp, 3Cp)
    b_all = jnp.stack([b1, b2, b3, b4], axis=0).reshape(4, Cp, 1)      # (4, Cp, 1) f32

    x_pad = jnp.pad(x_nchw, ((0, 0), (0, Cp - C), (0, 0), (0, 0)))     # (N, Cp, H, W)

    if lane_batch is None:
        lane_batch = (C < 32) and (N > 1)

    if lane_batch:
        # Tiny-shape regime: put several whole images on the lane axis so one
        # matmul spans them and the per-grid-step overhead is amortized.
        max_lanes = 65536
        ipb = 1
        for d in range(N, 0, -1):
            if N % d == 0 and d * HW <= max_lanes:
                ipb = d
                break
        L = ipb * HW
        grid = (N // ipb,)
        x_in = x_pad.transpose(1, 0, 2, 3).reshape(1, Cp, N * HW)
        arr_shape = (1, Cp, N * HW)
        img_spec = pl.BlockSpec((1, Cp, L), lambda i: (0, 0, i))
    else:
        # Realistic (large-C) regime: per-image blocks, no transpose needed.
        grid = (N,)
        x_in = x_pad.reshape(N, Cp, HW)
        arr_shape = (N, Cp, HW)
        img_spec = pl.BlockSpec((1, Cp, HW), lambda n: (n, 0, 0))

    w_spec = pl.BlockSpec((4, Cp, 3 * Cp), lambda i: (0, 0, 0))
    b_spec = pl.BlockSpec((4, Cp, 1), lambda i: (0, 0, 0))

    kernel = functools.partial(_nb1d_kernel, H=H, W=W, dil=dilated,
                               compute_dtype=compute_dtype)
    out_sum, out = pl.pallas_call(
        kernel,
        grid=grid,
        in_specs=[img_spec, w_spec, b_spec],
        out_specs=(img_spec, img_spec),
        out_shape=(jax.ShapeDtypeStruct(arr_shape, x_nchw.dtype),
                   jax.ShapeDtypeStruct(arr_shape, x_nchw.dtype)),
        compiler_params=pltpu.CompilerParams(
            dimension_semantics=("parallel",),
            vmem_limit_bytes=vmem_limit_bytes),
    )(x_in, w_all, b_all)

    def unlayout(y):
        if lane_batch:
            y = y.reshape(Cp, N, H, W).transpose(1, 0, 2, 3)
        else:
            y = y.reshape(N, Cp, H, W)
        return y[:, :C]

    return unlayout(out_sum), unlayout(out)


def _ref_forward(x, p, dilated):
    """Pure-JAX reference mirroring the PyTorch forward (eval-mode BN, p=0)."""
    def conv(a, w, b, pad, dil):
        y = jax.lax.conv_general_dilated(
            a, w, (1, 1), pad, rhs_dilation=dil,
            dimension_numbers=("NCHW", "OIHW", "NCHW"))
        return y + b[None, :, None, None]

    relu = lambda a: jnp.maximum(a, 0.0)

    def bn(a, g, b, m, v, eps=1e-3):
        s = g / jnp.sqrt(v + eps)
        return a * s[None, :, None, None] + (b - m * s)[None, :, None, None]

    o = relu(conv(x, p["w1"], p["b1"], ((1, 1), (0, 0)), (1, 1)))
    o = conv(o, p["w2"], p["b2"], ((0, 0), (1, 1)), (1, 1))
    o = relu(bn(o, p["g1"], p["be1"], p["m1"], p["v1"]))
    o = relu(conv(o, p["w3"], p["b3"], ((dilated, dilated), (0, 0)), (dilated, 1)))
    o = conv(o, p["w4"], p["b4"], ((0, 0), (dilated, dilated)), (1, dilated))
    o = bn(o, p["g2"], p["be2"], p["m2"], p["v2"])
    return relu(o + x), o


if __name__ == "__main__":
    N, C, H, W = 2, 4, 16, 16
    dilated = 2
    # dropprob = 0.0  -> the PyTorch module skips dropout entirely.

    key = jax.random.PRNGKey(0)
    ks = jax.random.split(key, 17)
    f32 = jnp.float32
    params = {
        "w1": 0.2 * jax.random.normal(ks[0], (C, C, 3, 1), f32),
        "b1": 0.1 * jax.random.normal(ks[1], (C,), f32),
        "w2": 0.2 * jax.random.normal(ks[2], (C, C, 1, 3), f32),
        "b2": 0.1 * jax.random.normal(ks[3], (C,), f32),
        "g1": 1.0 + 0.1 * jax.random.normal(ks[4], (C,), f32),
        "be1": 0.1 * jax.random.normal(ks[5], (C,), f32),
        "m1": 0.1 * jax.random.normal(ks[6], (C,), f32),
        "v1": jax.random.uniform(ks[7], (C,), f32, 0.5, 1.5),
        "w3": 0.2 * jax.random.normal(ks[8], (C, C, 3, 1), f32),
        "b3": 0.1 * jax.random.normal(ks[9], (C,), f32),
        "w4": 0.2 * jax.random.normal(ks[10], (C, C, 1, 3), f32),
        "b4": 0.1 * jax.random.normal(ks[11], (C,), f32),
        "g2": 1.0 + 0.1 * jax.random.normal(ks[12], (C,), f32),
        "be2": 0.1 * jax.random.normal(ks[13], (C,), f32),
        "m2": 0.1 * jax.random.normal(ks[14], (C,), f32),
        "v2": jax.random.uniform(ks[15], (C,), f32, 0.5, 1.5),
    }
    x = jax.random.normal(ks[16], (N, C, H, W), f32)

    ref_sum, ref_out = _ref_forward(x, params, dilated)

    # 1) Exact-semantics check: f32 matmuls, lane-batched layout, tight tolerance.
    out_sum, out = non_bottleneck_1d_forward(x, params, dilated,
                                             compute_dtype=jnp.float32)
    out_sum = jax.block_until_ready(out_sum)
    out = jax.block_until_ready(out)
    np.testing.assert_allclose(np.asarray(out_sum), np.asarray(ref_sum),
                               rtol=1e-4, atol=1e-4)
    np.testing.assert_allclose(np.asarray(out), np.asarray(ref_out),
                               rtol=1e-4, atol=1e-4)

    # 2) Fast path (default): bf16 matmul operands / activations, f32 accumulation.
    out_sum_bf, out_bf = non_bottleneck_1d_forward(x, params, dilated)
    out_sum_bf = jax.block_until_ready(out_sum_bf)
    out_bf = jax.block_until_ready(out_bf)
    np.testing.assert_allclose(np.asarray(out_sum_bf), np.asarray(ref_sum),
                               rtol=5e-2, atol=5e-2)
    np.testing.assert_allclose(np.asarray(out_bf), np.asarray(ref_out),
                               rtol=5e-2, atol=5e-2)

    # 3) Per-image (batch-grid) layout path, bf16.
    out_sum_bg, out_bg = non_bottleneck_1d_forward(x, params, dilated,
                                                   lane_batch=False)
    out_sum_bg = jax.block_until_ready(out_sum_bg)
    out_bg = jax.block_until_ready(out_bg)
    np.testing.assert_allclose(np.asarray(out_sum_bg), np.asarray(ref_sum),
                               rtol=5e-2, atol=5e-2)
    np.testing.assert_allclose(np.asarray(out_bg), np.asarray(ref_out),
                               rtol=5e-2, atol=5e-2)

    print("KERNEL_OK")
</pallas_src>

<mosaic_0001>
module attributes {stable_mosaic.version = 11 : i64} {
  func.func @_nb1d_kernel(%arg0: i32, %arg1: memref<1x8x512xf32, #tpu.memory_space<vmem>>, %arg2: memref<4x8x24xf32, #tpu.memory_space<vmem>>, %arg3: memref<4x8x1xf32, #tpu.memory_space<vmem>>, %arg4: memref<1x8x512xf32, #tpu.memory_space<vmem>>, %arg5: memref<1x8x512xf32, #tpu.memory_space<vmem>>) attributes {dimension_semantics = [#tpu.dimension_semantics<parallel>], iteration_bounds = array<i64: 1>, scalar_prefetch = 0 : i64, scratch_operands = 0 : i64, tpu.core_type = #tpu.core_type<tc>, window_params = [{transform_indices = @transform_0, window_bounds = array<i64: 1, 8, 512>}, {pipeline_mode = #tpu.pipeline_mode<synchronous>, transform_indices = @transform_1, window_bounds = array<i64: 4, 8, 24>}, {pipeline_mode = #tpu.pipeline_mode<synchronous>, transform_indices = @transform_2, window_bounds = array<i64: 4, 8, 1>}, {transform_indices = @transform_3, window_bounds = array<i64: 1, 8, 512>}, {transform_indices = @transform_4, window_bounds = array<i64: 1, 8, 512>}]} {
    %c0 = arith.constant 0 : index
    %c0_0 = arith.constant 0 : index
    %c0_1 = arith.constant 0 : index
    %0 = vector.load %arg1[%c0, %c0_0, %c0_1] : memref<1x8x512xf32, #tpu.memory_space<vmem>>, vector<1x8x512xf32>
    %1 = vector.shape_cast %0 : vector<1x8x512xf32> to vector<8x512xf32>
    %2 = tpu.iota {dimensions = array<i32: 1>} : vector<1x512xi32>
    %c256_i32 = arith.constant 256 : i32
    %c0_i32 = arith.constant 0 : i32
    %3 = arith.cmpi eq, %c256_i32, %c0_i32 : i32
    %c1_i32 = arith.constant 1 : i32
    %4 = arith.select %3, %c1_i32, %c256_i32 : i32
    %5 = vector.broadcast %4 : i32 to vector<1x512xi32>
    %6 = arith.remsi %2, %5 : vector<1x512xi32>
    %c0_i32_2 = arith.constant 0 : i32
    %7 = vector.broadcast %c0_i32_2 : i32 to vector<1x512xi32>
    %8 = arith.cmpi ne, %6, %7 : vector<1x512xi32>
    %c0_i32_3 = arith.constant 0 : i32
    %9 = vector.broadcast %c0_i32_3 : i32 to vector<1x512xi32>
    %10 = arith.cmpi slt, %6, %9 : vector<1x512xi32>
    %c0_i32_4 = arith.constant 0 : i32
    %11 = arith.cmpi slt, %4, %c0_i32_4 : i32
    %12 = vector.broadcast %11 : i1 to vector<1x512xi1>
    %13 = vector.broadcast %12 : vector<1x512xi1> to vector<1x512xi1>
    %14 = arith.xori %10, %13 : vector<1x512xi1>
    %15 = arith.andi %14, %8 : vector<1x512xi1>
    %16 = vector.broadcast %4 : i32 to vector<1x512xi32>
    %17 = arith.addi %6, %16 : vector<1x512xi32>
    %18 = arith.select %15, %17, %6 : vector<1x512xi1>, vector<1x512xi32>
    %c16_i32 = arith.constant 16 : i32
    %c0_i32_5 = arith.constant 0 : i32
    %19 = arith.cmpi eq, %c16_i32, %c0_i32_5 : i32
    %c1_i32_6 = arith.constant 1 : i32
    %20 = arith.select %19, %c1_i32_6, %c16_i32 : i32
    %21 = vector.broadcast %20 : i32 to vector<1x512xi32>
    %22 = arith.remsi %18, %21 : vector<1x512xi32>
    %c0_i32_7 = arith.constant 0 : i32
    %23 = vector.broadcast %c0_i32_7 : i32 to vector<1x512xi32>
    %24 = arith.cmpi ne, %22, %23 : vector<1x512xi32>
    %c0_i32_8 = arith.constant 0 : i32
    %25 = vector.broadcast %c0_i32_8 : i32 to vector<1x512xi32>
    %26 = arith.cmpi slt, %22, %25 : vector<1x512xi32>
    %c0_i32_9 = arith.constant 0 : i32
    %27 = arith.cmpi slt, %20, %c0_i32_9 : i32
    %28 = vector.broadcast %27 : i1 to vector<1x512xi1>
    %29 = vector.broadcast %28 : vector<1x512xi1> to vector<1x512xi1>
    %30 = arith.xori %26, %29 : vector<1x512xi1>
    %31 = arith.andi %30, %24 : vector<1x512xi1>
    %32 = vector.broadcast %20 : i32 to vector<1x512xi32>
    %33 = arith.addi %22, %32 : vector<1x512xi32>
    %34 = arith.select %31, %33, %22 : vector<1x512xi1>, vector<1x512xi32>
    %c16_i32_10 = arith.constant 16 : i32
    %35 = vector.broadcast %c16_i32_10 : i32 to vector<1x512xi32>
    %36 = arith.cmpi sge, %18, %35 : vector<1x512xi32>
    %c240_i32 = arith.constant 240 : i32
    %37 = vector.broadcast %c240_i32 : i32 to vector<1x512xi32>
    %38 = arith.cmpi slt, %18, %37 : vector<1x512xi32>
    %cst = arith.constant 0.000000e+00 : f32
    %39 = vector.broadcast %cst : f32 to vector<8x512xf32>
    %c16_i32_11 = arith.constant 16 : i32
    %40 = tpu.dynamic_rotate %1 by %c16_i32_11 dim 1 : vector<8x512xf32>, i32 -> vector<8x512xf32>
    %41 = vector.shape_cast %36 : vector<1x512xi1> to vector<1x512xi1>
    %42 = vector.broadcast %41 : vector<1x512xi1> to vector<8x512xi1>
    %43 = arith.select %42, %40, %39 : vector<8x512xi1>, vector<8x512xf32>
    %c496_i32 = arith.constant 496 : i32
    %44 = tpu.dynamic_rotate %1 by %c496_i32 dim 1 : vector<8x512xf32>, i32 -> vector<8x512xf32>
    %45 = vector.shape_cast %38 : vector<1x512xi1> to vector<1x512xi1>
    %46 = vector.broadcast %45 : vector<1x512xi1> to vector<8x512xi1>
    %47 = arith.select %46, %44, %39 : vector<8x512xi1>, vector<8x512xf32>
    %48 = tpu.concatenate %43, %1, %47 in 0 : vector<8x512xf32>, vector<8x512xf32>, vector<8x512xf32> -> vector<24x512xf32>
    %c0_12 = arith.constant 0 : index
    %c0_13 = arith.constant 0 : index
    %c0_14 = arith.constant 0 : index
    %49 = vector.load %arg2[%c0_12, %c0_13, %c0_14] : memref<4x8x24xf32, #tpu.memory_space<vmem>>, vector<1x8x24xf32>
    %50 = vector.shape_cast %49 : vector<1x8x24xf32> to vector<8x24xf32>
    %cst_15 = arith.constant dense<0.000000e+00> : vector<8x512xf32>
    %51 = tpu.matmul %50, %48, %cst_15 {dimension_numbers = #tpu.dot_dimension_numbers<[1], [0], [0], [1], [0, 0, 1, 1], [], []>} : vector<8x24xf32>, vector<24x512xf32>, vector<8x512xf32> -> vector<8x512xf32>
    %c0_16 = arith.constant 0 : index
    %c0_17 = arith.constant 0 : index
    %c0_18 = arith.constant 0 : index
    %52 = vector.load %arg3[%c0_16, %c0_17, %c0_18] : memref<4x8x1xf32, #tpu.memory_space<vmem>>, vector<1x8x1xf32>
    %53 = vector.shape_cast %52 : vector<1x8x1xf32> to vector<8x1xf32>
    %54 = vector.broadcast %53 : vector<8x1xf32> to vector<8x512xf32>
    %55 = arith.addf %51, %54 : vector<8x512xf32>
    %cst_19 = arith.constant 0.000000e+00 : f32
    %56 = vector.broadcast %cst_19 : f32 to vector<8x512xf32>
    %57 = arith.maximumf %55, %56 : vector<8x512xf32>
    %c1_i32_20 = arith.constant 1 : i32
    %58 = vector.broadcast %c1_i32_20 : i32 to vector<1x512xi32>
    %59 = arith.cmpi sge, %34, %58 : vector<1x512xi32>
    %c15_i32 = arith.constant 15 : i32
    %60 = vector.broadcast %c15_i32 : i32 to vector<1x512xi32>
    %61 = arith.cmpi slt, %34, %60 : vector<1x512xi32>
    %cst_21 = arith.constant 0.000000e+00 : f32
    %62 = vector.broadcast %cst_21 : f32 to vector<8x512xf32>
    %c1_i32_22 = arith.constant 1 : i32
    %63 = tpu.dynamic_rotate %57 by %c1_i32_22 dim 1 : vector<8x512xf32>, i32 -> vector<8x512xf32>
    %64 = vector.shape_cast %59 : vector<1x512xi1> to vector<1x512xi1>
    %65 = vector.broadcast %64 : vector<1x512xi1> to vector<8x512xi1>
    %66 = arith.select %65, %63, %62 : vector<8x512xi1>, vector<8x512xf32>
    %c511_i32 = arith.constant 511 : i32
    %67 = tpu.dynamic_rotate %57 by %c511_i32 dim 1 : vector<8x512xf32>, i32 -> vector<8x512xf32>
    %68 = vector.shape_cast %61 : vector<1x512xi1> to vector<1x512xi1>
    %69 = vector.broadcast %68 : vector<1x512xi1> to vector<8x512xi1>
    %70 = arith.select %69, %67, %62 : vector<8x512xi1>, vector<8x512xf32>
    %71 = tpu.concatenate %66, %57, %70 in 0 : vector<8x512xf32>, vector<8x512xf32>, vector<8x512xf32> -> vector<24x512xf32>
    %c1 = arith.constant 1 : index
    %c0_23 = arith.constant 0 : index
    %c0_24 = arith.constant 0 : index
    %72 = vector.load %arg2[%c1, %c0_23, %c0_24] : memref<4x8x24xf32, #tpu.memory_space<vmem>>, vector<1x8x24xf32>
    %73 = vector.shape_cast %72 : vector<1x8x24xf32> to vector<8x24xf32>
    %cst_25 = arith.constant dense<0.000000e+00> : vector<8x512xf32>
    %74 = tpu.matmul %73, %71, %cst_25 {dimension_numbers = #tpu.dot_dimension_numbers<[1], [0], [0], [1], [0, 0, 1, 1], [], []>} : vector<8x24xf32>, vector<24x512xf32>, vector<8x512xf32> -> vector<8x512xf32>
    %c1_26 = arith.constant 1 : index
    %c0_27 = arith.constant 0 : index
    %c0_28 = arith.constant 0 : index
    %75 = vector.load %arg3[%c1_26, %c0_27, %c0_28] : memref<4x8x1xf32, #tpu.memory_space<vmem>>, vector<1x8x1xf32>
    %76 = vector.shape_cast %75 : vector<1x8x1xf32> to vector<8x1xf32>
    %77 = vector.broadcast %76 : vector<8x1xf32> to vector<8x512xf32>
    %78 = arith.addf %74, %77 : vector<8x512xf32>
    %cst_29 = arith.constant 0.000000e+00 : f32
    %79 = vector.broadcast %cst_29 : f32 to vector<8x512xf32>
    %80 = arith.maximumf %78, %79 : vector<8x512xf32>
    %c32_i32 = arith.constant 32 : i32
    %81 = vector.broadcast %c32_i32 : i32 to vector<1x512xi32>
    %82 = arith.cmpi sge, %18, %81 : vector<1x512xi32>
    %c224_i32 = arith.constant 224 : i32
    %83 = vector.broadcast %c224_i32 : i32 to vector<1x512xi32>
    %84 = arith.cmpi slt, %18, %83 : vector<1x512xi32>
    %cst_30 = arith.constant 0.000000e+00 : f32
    %85 = vector.broadcast %cst_30 : f32 to vector<8x512xf32>
    %c32_i32_31 = arith.constant 32 : i32
    %86 = tpu.dynamic_rotate %80 by %c32_i32_31 dim 1 : vector<8x512xf32>, i32 -> vector<8x512xf32>
    %87 = vector.shape_cast %82 : vector<1x512xi1> to vector<1x512xi1>
    %88 = vector.broadcast %87 : vector<1x512xi1> to vector<8x512xi1>
    %89 = arith.select %88, %86, %85 : vector<8x512xi1>, vector<8x512xf32>
    %c480_i32 = arith.constant 480 : i32
    %90 = tpu.dynamic_rotate %80 by %c480_i32 dim 1 : vector<8x512xf32>, i32 -> vector<8x512xf32>
    %91 = vector.shape_cast %84 : vector<1x512xi1> to vector<1x512xi1>
    %92 = vector.broadcast %91 : vector<1x512xi1> to vector<8x512xi1>
    %93 = arith.select %92, %90, %85 : vector<8x512xi1>, vector<8x512xf32>
    %94 = tpu.concatenate %89, %80, %93 in 0 : vector<8x512xf32>, vector<8x512xf32>, vector<8x512xf32> -> vector<24x512xf32>
    %c2 = arith.constant 2 : index
    %c0_32 = arith.constant 0 : index
    %c0_33 = arith.constant 0 : index
    %95 = vector.load %arg2[%c2, %c0_32, %c0_33] : memref<4x8x24xf32, #tpu.memory_space<vmem>>, vector<1x8x24xf32>
    %96 = vector.shape_cast %95 : vector<1x8x24xf32> to vector<8x24xf32>
    %cst_34 = arith.constant dense<0.000000e+00> : vector<8x512xf32>
    %97 = tpu.matmul %96, %94, %cst_34 {dimension_numbers = #tpu.dot_dimension_numbers<[1], [0], [0], [1], [0, 0, 1, 1], [], []>} : vector<8x24xf32>, vector<24x512xf32>, vector<8x512xf32> -> vector<8x512xf32>
    %c2_35 = arith.constant 2 : index
    %c0_36 = arith.constant 0 : index
    %c0_37 = arith.constant 0 : index
    %98 = vector.load %arg3[%c2_35, %c0_36, %c0_37] : memref<4x8x1xf32, #tpu.memory_space<vmem>>, vector<1x8x1xf32>
    %99 = vector.shape_cast %98 : vector<1x8x1xf32> to vector<8x1xf32>
    %100 = vector.broadcast %99 : vector<8x1xf32> to vector<8x512xf32>
    %101 = arith.addf %97, %100 : vector<8x512xf32>
    %cst_38 = arith.constant 0.000000e+00 : f32
    %102 = vector.broadcast %cst_38 : f32 to vector<8x512xf32>
    %103 = arith.maximumf %101, %102 : vector<8x512xf32>
    %c2_i32 = arith.constant 2 : i32
    %104 = vector.broadcast %c2_i32 : i32 to vector<1x512xi32>
    %105 = arith.cmpi sge, %34, %104 : vector<1x512xi32>
    %c14_i32 = arith.constant 14 : i32
    %106 = vector.broadcast %c14_i32 : i32 to vector<1x512xi32>
    %107 = arith.cmpi slt, %34, %106 : vector<1x512xi32>
    %cst_39 = arith.constant 0.000000e+00 : f32
    %108 = vector.broadcast %cst_39 : f32 to vector<8x512xf32>
    %c2_i32_40 = arith.constant 2 : i32
    %109 = tpu.dynamic_rotate %103 by %c2_i32_40 dim 1 : vector<8x512xf32>, i32 -> vector<8x512xf32>
    %110 = vector.shape_cast %105 : vector<1x512xi1> to vector<1x512xi1>
    %111 = vector.broadcast %110 : vector<1x512xi1> to vector<8x512xi1>
    %112 = arith.select %111, %109, %108 : vector<8x512xi1>, vector<8x512xf32>
    %c510_i32 = arith.constant 510 : i32
    %113 = tpu.dynamic_rotate %103 by %c510_i32 dim 1 : vector<8x512xf32>, i32 -> vector<8x512xf32>
    %114 = vector.shape_cast %107 : vector<1x512xi1> to vector<1x512xi1>
    %115 = vector.broadcast %114 : vector<1x512xi1> to vector<8x512xi1>
    %116 = arith.select %115, %113, %108 : vector<8x512xi1>, vector<8x512xf32>
    %117 = tpu.concatenate %112, %103, %116 in 0 : vector<8x512xf32>, vector<8x512xf32>, vector<8x512xf32> -> vector<24x512xf32>
    %c3 = arith.constant 3 : index
    %c0_41 = arith.constant 0 : index
    %c0_42 = arith.constant 0 : index
    %118 = vector.load %arg2[%c3, %c0_41, %c0_42] : memref<4x8x24xf32, #tpu.memory_space<vmem>>, vector<1x8x24xf32>
    %119 = vector.shape_cast %118 : vector<1x8x24xf32> to vector<8x24xf32>
    %cst_43 = arith.constant dense<0.000000e+00> : vector<8x512xf32>
    %120 = tpu.matmul %119, %117, %cst_43 {dimension_numbers = #tpu.dot_dimension_numbers<[1], [0], [0], [1], [0, 0, 1, 1], [], []>} : vector<8x24xf32>, vector<24x512xf32>, vector<8x512xf32> -> vector<8x512xf32>
    %c3_44 = arith.constant 3 : index
    %c0_45 = arith.constant 0 : index
    %c0_46 = arith.constant 0 : index
    %121 = vector.load %arg3[%c3_44, %c0_45, %c0_46] : memref<4x8x1xf32, #tpu.memory_space<vmem>>, vector<1x8x1xf32>
    %122 = vector.shape_cast %121 : vector<1x8x1xf32> to vector<8x1xf32>
    %123 = vector.broadcast %122 : vector<8x1xf32> to vector<8x512xf32>
    %124 = arith.addf %120, %123 : vector<8x512xf32>
    %c0_47 = arith.constant 0 : index
    %c0_48 = arith.constant 0 : index
    %c0_49 = arith.constant 0 : index
    %125 = vector.load %arg5[%c0_47, %c0_48, %c0_49] : memref<1x8x512xf32, #tpu.memory_space<vmem>>, vector<1x8x512xf32>
    %126 = vector.shape_cast %125 : vector<1x8x512xf32> to vector<8x512xf32>
    %127 = vector.shape_cast %124 : vector<8x512xf32> to vector<1x8x512xf32>
    tpu.vector_store %arg5[%c0_47, %c0_48, %c0_49], %127 {strides = array<i32>} : memref<1x8x512xf32, #tpu.memory_space<vmem>>, vector<1x8x512xf32>,
    %128 = arith.addf %124, %1 : vector<8x512xf32>
    %cst_50 = arith.constant 0.000000e+00 : f32
    %129 = vector.broadcast %cst_50 : f32 to vector<8x512xf32>
    %130 = arith.maximumf %128, %129 : vector<8x512xf32>
    %c0_51 = arith.constant 0 : index
    %c0_52 = arith.constant 0 : index
    %c0_53 = arith.constant 0 : index
    %131 = vector.load %arg4[%c0_51, %c0_52, %c0_53] : memref<1x8x512xf32, #tpu.memory_space<vmem>>, vector<1x8x512xf32>
    %132 = vector.shape_cast %131 : vector<1x8x512xf32> to vector<8x512xf32>
    %133 = vector.shape_cast %130 : vector<8x512xf32> to vector<1x8x512xf32>
    tpu.vector_store %arg4[%c0_51, %c0_52, %c0_53], %133 {strides = array<i32>} : memref<1x8x512xf32, #tpu.memory_space<vmem>>, vector<1x8x512xf32>,
    return
  }
  func.func @transform_0(%arg0: i32) -> (i32, i32, i32) {
    %c0_i32 = arith.constant 0 : i32
    %c0_i32_0 = arith.constant 0 : i32
    %c0_i32_1 = arith.constant 0 : i32
    return %c0_i32, %c0_i32_0, %arg0 : i32, i32, i32
  }
  func.func @transform_1(%arg0: i32) -> (i32, i32, i32) {
    %c0_i32 = arith.constant 0 : i32
    %c0_i32_0 = arith.constant 0 : i32
    %c0_i32_1 = arith.constant 0 : i32
    %c0_i32_2 = arith.constant 0 : i32
    return %c0_i32, %c0_i32_0, %c0_i32_1 : i32, i32, i32
  }
  func.func @transform_2(%arg0: i32) -> (i32, i32, i32) {
    %c0_i32 = arith.constant 0 : i32
    %c0_i32_0 = arith.constant 0 : i32
    %c0_i32_1 = arith.constant 0 : i32
    %c0_i32_2 = arith.constant 0 : i32
    return %c0_i32, %c0_i32_0, %c0_i32_1 : i32, i32, i32
  }
  func.func @transform_3(%arg0: i32) -> (i32, i32, i32) {
    %c0_i32 = arith.constant 0 : i32
    %c0_i32_0 = arith.constant 0 : i32
    %c0_i32_1 = arith.constant 0 : i32
    return %c0_i32, %c0_i32_0, %arg0 : i32, i32, i32
  }
  func.func @transform_4(%arg0: i32) -> (i32, i32, i32) {
    %c0_i32 = arith.constant 0 : i32
    %c0_i32_0 = arith.constant 0 : i32
    %c0_i32_1 = arith.constant 0 : i32
    return %c0_i32, %c0_i32_0, %arg0 : i32, i32, i32
  }
}

</mosaic_0001>

<llo_original>
// kernel: tpu_custom_call.1
$region0: #{tpu_custom_call.1}
  #allocation0 [shape = 'u32[]', space=smem, size = 0x4, offset = 0x4, fixed_abs, tag = 'smem constant byte address 0x4 - core index']
  #allocation1 [shape = 'u32[144,128]{1,0:T(1,128)}', space=vmem, size = 0x12000, scoped, tag = 'internal scratch']
  %s0 = inlined_call_operand.hbm [shape: f32[1,8,512], index: 0, kind: input, shape index: {}]
  %s1 = inlined_call_operand.hbm [shape: f32[4,8,24], index: 1, kind: input, shape index: {}]
  %s2 = inlined_call_operand.hbm [shape: f32[4,8,1], index: 2, kind: input, shape index: {}]
  %s3 = inlined_call_operand.hbm [shape: f32[1,8,512], index: 3, kind: output, shape index: {0}]
  %s4 = inlined_call_operand.hbm [shape: f32[1,8,512], index: 4, kind: output, shape index: {1}]
  %5 = xla_tuple %s3, %s4
  %s6 = sld [smem:[#allocation0]]
  $region42: #{tpu_custom_call.1} parent=0
    _
  %s8 = ssub.s32 1, %s6
  %s9 = scalar_select 0, %s8, %s6
  $region1: #{tpu_custom_call.1} parent=0
    #allocation2 [shape = 'u8[16384]{0}', space=vmem, size = 0x4000, scoped, tag = 'input window, operand 0, single buffered']
    #allocation3 [shape = 's32[1]{0}', space=sflag, size = 0x4, scoped, tag = 'scoped memory for tpu_custom_call.1']
    #allocation4 [shape = 's32[1]{0}', space=sflag, size = 0x4, scoped, tag = 'scoped memory for tpu_custom_call.1']
    #allocation5 [shape = 'u8[16384]{0}', space=vmem, size = 0x4000, scoped, tag = 'input window, operand 1, single buffered']
    #allocation6 [shape = 's32[1]{0}', space=sflag, size = 0x4, scoped, tag = 'scoped memory for tpu_custom_call.1']
    #allocation7 [shape = 'u8[16384]{0}', space=vmem, size = 0x4000, scoped, tag = 'input window, operand 2, single buffered']
    #allocation8 [shape = 'u8[16384]{0}', space=vmem, size = 0x4000, scoped, tag = 'output window, operand 0, single buffered']
    #allocation9 [shape = 'u8[16384]{0}', space=vmem, size = 0x4000, scoped, tag = 'output window, operand 1, single buffered']
    #allocation10 [shape = 's32[1]{0}', space=sflag, size = 0x4, scoped, tag = 'scoped memory for tpu_custom_call.1']
    %10 = vsyncpa [#allocation3], 0
    %11 = vsyncpa [#allocation6], 0
    %12 = vsyncpa [#allocation4], 0
    %13 = vsyncpa [#allocation10], 0
    // Predicated region
    $region2: #{tpu_custom_call.1} parent=1 // pred_check
      _
    $region3: #{tpu_custom_call.1} parent=1 // pred_check_branch
      %15 = sbr.rel (0) target = $region5
    $region4: #{tpu_custom_call.1} parent=1 // pred_region
      %s17 = ssub.s32 512, 512
      %18 = vsyncadd [#allocation3], %s17
      %s20 = sshll.u32 [#allocation2], 4
      %s21 = int_to_ptr.vmem [resolvable:$true] %s20
      %23 = dma.hbm_to_vmem [thread:$0]  %s0, 512, %s21, [#allocation3]
    $region5: #{tpu_custom_call.1} parent=1 // pred_fallthru
      _
    // Predicated region
    $region6: #{tpu_custom_call.1} parent=1 // pred_check
      _
    $region7: #{tpu_custom_call.1} parent=1 // pred_check_branch
      %25 = sbr.rel (0) target = $region9
    $region8: #{tpu_custom_call.1} parent=1 // pred_region
      %s27 = ssub.s32 512, 512
      %28 = vsyncadd [#allocation6], %s27
      %s29 = sshll.u32 [#allocation5], 4
      %s30 = int_to_ptr.vmem [resolvable:$true] %s29
      %35 = dma.hbm_to_vmem [thread:$0]  %s1, 512, %s30, [#allocation6], 128, 128, 8
    $region9: #{tpu_custom_call.1} parent=1 // pred_fallthru
      _
    // Predicated region
    $region10: #{tpu_custom_call.1} parent=1 // pred_check
      _
    $region11: #{tpu_custom_call.1} parent=1 // pred_check_branch
      %37 = sbr.rel (0) target = $region13
    $region12: #{tpu_custom_call.1} parent=1 // pred_region
      %s39 = ssub.s32 512, 512
      %40 = vsyncadd [#allocation6], %s39
      %s41 = sshll.u32 [#allocation7], 4
      %s42 = int_to_ptr.vmem [resolvable:$true] %s41
      %47 = dma.hbm_to_vmem [thread:$0]  %s2, 512, %s42, [#allocation6], 128, 128, 8
    $region13: #{tpu_custom_call.1} parent=1 // pred_fallthru
      _
    // Predicated region
    $region14: #{tpu_custom_call.1} parent=1 // pred_check
      _
    $region15: #{tpu_custom_call.1} parent=1 // pred_check_branch
      %49 = sbr.rel (0) target = $region17
    $region16: #{tpu_custom_call.1} parent=1 // pred_region
      %50 = dma.done [#allocation3], 512
    $region17: #{tpu_custom_call.1} parent=1 // pred_fallthru
      _
    // Predicated region
    $region18: #{tpu_custom_call.1} parent=1 // pred_check
      _
    $region19: #{tpu_custom_call.1} parent=1 // pred_check_branch
      %52 = sbr.rel (0) target = $region21
    $region20: #{tpu_custom_call.1} parent=1 // pred_region
      %53 = dma.done [#allocation6], 512
    $region21: #{tpu_custom_call.1} parent=1 // pred_fallthru
      _
    // Predicated region
    $region22: #{tpu_custom_call.1} parent=1 // pred_check
      _
    $region23: #{tpu_custom_call.1} parent=1 // pred_check_branch
      %55 = sbr.rel (0) target = $region25
    $region24: #{tpu_custom_call.1} parent=1 // pred_region
      %56 = dma.done [#allocation6], 512
    $region25: #{tpu_custom_call.1} parent=1 // pred_fallthru
      _
    %v57 = vld [vmem:[#allocation2] sm:$0xff]
    %v58 = vld [vmem:[#allocation2 + $0x8] sm:$0xff]
    %v59 = vld [vmem:[#allocation2 + $0x10] sm:$0xff]
    %v60 = vld [vmem:[#allocation2 + $0x18] sm:$0xff]
    %v61 = vlaneseq
    %v62 = vand.u32 %v61, 127
    %v63 = vadd.s32 %v62, 128
    %v64 = vadd.s32 %v62, 256
    %v65 = vadd.s32 %v62, 384
    %vm66 = vcmp.lt.s32.totalorder %v62, 0
    %v67 = vsub.s32 0, %v62
    %v68 = vsel %vm66, %v67, %v62
    %v69 = vshrl.u32 %v68, 8
    %v70 = vand.u32 %v68, 255
    %v71 = vsub.s32 0, %v70
    %v72 = vsel %vm66, %v71, %v70
    %vm73 = vcmp.lt.s32.totalorder %v63, 0
    %v74 = vsub.s32 0, %v63
    %v75 = vsel %vm73, %v74, %v63
    %v76 = vshrl.u32 %v75, 8
    %v77 = vand.u32 %v75, 255
    %v78 = vsub.s32 0, %v77
    %v79 = vsel %vm73, %v78, %v77
    %vm80 = vcmp.lt.s32.totalorder %v64, 0
    %v81 = vsub.s32 0, %v64
    %v82 = vsel %vm80, %v81, %v64
    %v83 = vshrl.u32 %v82, 8
    %v84 = vand.u32 %v82, 255
    %v85 = vsub.s32 0, %v84
    %v86 = vsel %vm80, %v85, %v84
    %vm87 = vcmp.lt.s32.totalorder %v65, 0
    %v88 = vsub.s32 0, %v65
    %v89 = vsel %vm87, %v88, %v65
    %v90 = vshrl.u32 %v89, 8
    %v91 = vand.u32 %v89, 255
    %v92 = vsub.s32 0, %v91
    %v93 = vsel %vm87, %v92, %v91
    %vm94 = vcmp.ne.s32.totalorder %v72, 0
    %vm95 = vcmp.ne.s32.totalorder %v79, 0
    %vm96 = vcmp.ne.s32.totalorder %v86, 0
    %vm97 = vcmp.ne.s32.totalorder %v93, 0
    %vm98 = vcmp.lt.s32.totalorder %v72, 0
    %vm99 = vcmp.lt.s32.totalorder %v79, 0
    %vm100 = vcmp.lt.s32.totalorder %v86, 0
    %vm101 = vcmp.lt.s32.totalorder %v93, 0
    %vm102 = vmand %vm98, %vm94
    %vm103 = vmand %vm99, %vm95
    %vm104 = vmand %vm100, %vm96
    %vm105 = vmand %vm101, %vm97
    %v106 = vadd.s32 %v72, 256
    %v107 = vadd.s32 %v79, 256
    %v108 = vadd.s32 %v86, 256
    %v109 = vadd.s32 %v93, 256
    %v110 = vsel %vm102, %v106, %v72
    %v111 = vsel %vm103, %v107, %v79
    %v112 = vsel %vm104, %v108, %v86
    %v113 = vsel %vm105, %v109, %v93
    %vm114 = vcmp.lt.s32.totalorder %v110, 0
    %v115 = vsub.s32 0, %v110
    %v116 = vsel %vm114, %v115, %v110
    %v117 = vshrl.u32 %v116, 4
    %v118 = vand.u32 %v116, 15
    %v119 = vsub.s32 0, %v118
    %v120 = vsel %vm114, %v119, %v118
    %vm121 = vcmp.lt.s32.totalorder %v111, 0
    %v122 = vsub.s32 0, %v111
    %v123 = vsel %vm121, %v122, %v111
    %v124 = vshrl.u32 %v123, 4
    %v125 = vand.u32 %v123, 15
    %v126 = vsub.s32 0, %v125
    %v127 = vsel %vm121, %v126, %v125
    %vm128 = vcmp.lt.s32.totalorder %v112, 0
    %v129 = vsub.s32 0, %v112
    %v130 = vsel %vm128, %v129, %v112
    %v131 = vshrl.u32 %v130, 4
    %v132 = vand.u32 %v130, 15
    %v133 = vsub.s32 0, %v132
    %v134 = vsel %vm128, %v133, %v132
    %vm135 = vcmp.lt.s32.totalorder %v113, 0
    %v136 = vsub.s32 0, %v113
    %v137 = vsel %vm135, %v136, %v113
    %v138 = vshrl.u32 %v137, 4
    %v139 = vand.u32 %v137, 15
    %v140 = vsub.s32 0, %v139
    %v141 = vsel %vm135, %v140, %v139
    %vm142 = vcmp.ne.s32.totalorder %v120, 0
    %vm143 = vcmp.ne.s32.totalorder %v127, 0
    %vm144 = vcmp.ne.s32.totalorder %v134, 0
    %vm145 = vcmp.ne.s32.totalorder %v141, 0
    %vm146 = vcmp.lt.s32.totalorder %v120, 0
    %vm147 = vcmp.lt.s32.totalorder %v127, 0
    %vm148 = vcmp.lt.s32.totalorder %v134, 0
    %vm149 = vcmp.lt.s32.totalorder %v141, 0
    %vm150 = vmand %vm146, %vm142
    %vm151 = vmand %vm147, %vm143
    %vm152 = vmand %vm148, %vm144
    %vm153 = vmand %vm149, %vm145
    %v154 = vadd.s32 %v120, 16
    %v155 = vadd.s32 %v127, 16
    %v156 = vadd.s32 %v134, 16
    %v157 = vadd.s32 %v141, 16
    %v158 = vsel %vm150, %v154, %v120
    %v159 = vsel %vm151, %v155, %v127
    %v160 = vsel %vm152, %v156, %v134
    %v161 = vsel %vm153, %v157, %v141
    %vm162 = vcmp.ge.s32.totalorder %v110, 16
    %vm163 = vcmp.ge.s32.totalorder %v111, 16
    %vm164 = vcmp.ge.s32.totalorder %v112, 16
    %vm165 = vcmp.ge.s32.totalorder %v113, 16
    %vm166 = vcmp.lt.s32.totalorder %v110, 240
    %vm167 = vcmp.lt.s32.totalorder %v111, 240
    %vm168 = vcmp.lt.s32.totalorder %v112, 240
    %vm169 = vcmp.lt.s32.totalorder %v113, 240
    %170 = vrot.lane.b32.xlu0 %v57, 16
    %v171 = vpop.permute.xlu0 %170
    %172 = vrot.lane.b32.xlu0 %v58, 16
    %v173 = vpop.permute.xlu0 %172
    %174 = vrot.lane.b32.xlu0 %v59, 16
    %v175 = vpop.permute.xlu0 %174
    %176 = vrot.lane.b32.xlu0 %v60, 16
    %v177 = vpop.permute.xlu0 %176
    %vm178 = vcmp.lt.s32.totalorder %v62, 16
    %v179 = vsel %vm178, %v175, %v177
    %v180 = vsel %vm178, %v173, %v175
    %v181 = vsel %vm178, %v171, %v173
    %v182 = vsel %vm178, %v177, %v171
    %v183 = vsel %vm162, 1, 0
    %v184 = vsel %vm163, 1, 0
    %v185 = vsel %vm164, 1, 0
    %v186 = vsel %vm165, 1, 0
    %vm187 = vcmp.eq.s32.totalorder %v183, 1
    %vm188 = vcmp.eq.s32.totalorder %v184, 1
    %vm189 = vcmp.eq.s32.totalorder %v185, 1
    %vm190 = vcmp.eq.s32.totalorder %v186, 1
    %v191 = vsel %vm187, %v182, 0.0
    %v192 = vsel %vm188, %v181, 0.0
    %v193 = vsel %vm189, %v180, 0.0
    %v194 = vsel %vm190, %v179, 0.0
    %195 = vrot.lane.b32.xlu0 %v57, 112
    %v196 = vpop.permute.xlu0 %195
    %197 = vrot.lane.b32.xlu0 %v58, 112
    %v198 = vpop.permute.xlu0 %197
    %199 = vrot.lane.b32.xlu0 %v59, 112
    %v200 = vpop.permute.xlu0 %199
    %201 = vrot.lane.b32.xlu0 %v60, 112
    %v202 = vpop.permute.xlu0 %201
    %vm203 = vcmp.lt.s32.totalorder %v62, 112
    %v204 = vsel %vm203, %v200, %v202
    %v205 = vsel %vm203, %v198, %v200
    %v206 = vsel %vm203, %v196, %v198
    %v207 = vsel %vm203, %v202, %v196
    %v208 = vsel %vm166, 1, 0
    %v209 = vsel %vm167, 1, 0
    %v210 = vsel %vm168, 1, 0
    %v211 = vsel %vm169, 1, 0
    %vm212 = vcmp.eq.s32.totalorder %v208, 1
    %vm213 = vcmp.eq.s32.totalorder %v209, 1
    %vm214 = vcmp.eq.s32.totalorder %v210, 1
    %vm215 = vcmp.eq.s32.totalorder %v211, 1
    %v216 = vsel %vm212, %v206, 0.0
    %v217 = vsel %vm213, %v205, 0.0
    %v218 = vsel %vm214, %v204, 0.0
    %v219 = vsel %vm215, %v207, 0.0
    %v220 = vld [vmem:[#allocation5] sm:$0xff]
    %v221 = vld [vmem:[#allocation7] sm:$0xff]
    %223 = vset.pattern.permute.xlu0 0
    %224 = vperm.xlu0 %223, %v221
    %v225 = vpop.permute.xlu0 %224
    %vm227 = vcmask 195584
    %v229 = vsel %vm227, %v220, 0
    %231 = vmatprep.subr.mxu0 %v192
    %232 = vmatpush1.msra.mxu0 %v191
    %233 = vmatprep.subr.mxu0 %v58
    %234 = vmatpush1.msra.mxu0 %v57
    %235 = vmatprep.subr.mxu0 %v217
    %236 = vmatpush1.msra.mxu0 %v216
    %237 = vmatprep.subr.mxu0 0.0
    %238 = vmatpush1.msra.mxu0 0.0
    %239 = vmatprep.subr.mxu0 0.0
    %240 = vmatpush1.msra.mxu0 0.0
    %241 = vmatprep.subr.mxu0 0.0
    %242 = vmatpush1.msra.mxu0 0.0
    %243 = vmatprep.subr.mxu0 0.0
    %244 = vmatpush1.msra.mxu0 0.0
    %245 = vmatprep.subr.mxu0 0.0
    %246 = vmatpush1.msra.mxu0 0.0
    %247 = vmatprep.subr.mxu0 0.0
    %248 = vmatpush1.msra.mxu0 0.0
    %249 = vmatprep.subr.mxu0 0.0
    %250 = vmatpush1.msra.mxu0 0.0
    %251 = vmatprep.subr.mxu0 0.0
    %252 = vmatpush1.msra.mxu0 0.0
    %253 = vmatprep.subr.mxu0 0.0
    %254 = vmatpush1.msra.mxu0 0.0
    %255 = vmatprep.subr.mxu0 0.0
    %256 = vmatpush1.msra.mxu0 0.0
    %257 = vmatprep.subr.mxu0 0.0
    %258 = vmatpush1.msra.mxu0 0.0
    %259 = vmatprep.subr.mxu0 0.0
    %260 = vmatpush1.msra.mxu0 0.0
    %261 = vmatprep.subr.mxu0 0.0
    %262 = vmatpush1.msra.mxu0 0.0
    %263 = vmatprep.subr.mxu0 0.0
    %264 = vmatpush1.msra.mxu0 0.0
    %265 = vmatprep.subr.mxu0 0.0
    %266 = vmatpush1.msra.mxu0 0.0
    %267 = vmatprep.subr.mxu0 0.0
    %268 = vmatpush1.msra.mxu0 0.0
    %269 = vmatprep.subr.mxu0 0.0
    %270 = vmatpush1.msra.mxu0 0.0
    %271 = vmatprep.subr.mxu0 0.0
    %272 = vmatpush1.msra.mxu0 0.0
    %273 = vmatprep.subr.mxu0 0.0
    %274 = vmatpush1.msra.mxu0 0.0
    %275 = vmatprep.subr.mxu0 0.0
    %276 = vmatpush1.msra.mxu0 0.0
    %277 = vmatprep.subr.mxu0 0.0
    %278 = vmatpush1.msra.mxu0 0.0
    %279 = vmatprep.subr.mxu0 0.0
    %280 = vmatpush1.msra.mxu0 0.0
    %281 = vmatprep.subr.mxu0 0.0
    %282 = vmatpush1.msra.mxu0 0.0
    %283 = vmatprep.subr.mxu0 0.0
    %284 = vmatpush1.msra.mxu0 0.0
    %285 = vmatprep.subr.mxu0 0.0
    %286 = vmatpush1.msra.mxu0 0.0
    %287 = vmatprep.subr.mxu0 0.0
    %288 = vmatpush1.msra.mxu0 0.0
    %289 = vmatprep.subr.mxu0 0.0
    %290 = vmatpush1.msra.mxu0 0.0
    %291 = vmatprep.subr.mxu0 0.0
    %292 = vmatpush1.msra.mxu0 0.0
    %293 = vmatprep.subr.mxu0 0.0
    %294 = vmatpush1.msra.mxu0 0.0
    %295 = vmatprep.mubr.f32.mxu0 0.0
    %296 = vmatmul.mubr.f32.gmra.mrb[0].mxu0 %v229
    %v297 = vpop.f32.mrb[0].mxu0
    %v298 = vadd.f32 %v225, %v297
    %v299 = vpop.f32.mrb[0].mxu0
    %v300 = vadd.f32 %v225, %v299
    %301 = vdwg.mxu0
    %302 = vmatprep.subr.mxu0 %v194
    %303 = vmatpush1.msra.mxu0 %v193
    %304 = vmatprep.subr.mxu0 %v60
    %305 = vmatpush1.msra.mxu0 %v59
    %306 = vmatprep.subr.mxu0 %v219
    %307 = vmatpush1.msra.mxu0 %v218
    %308 = vmatprep.subr.mxu0 0.0
    %309 = vmatpush1.msra.mxu0 0.0
    %310 = vmatprep.subr.mxu0 0.0
    %311 = vmatpush1.msra.mxu0 0.0
    %312 = vmatprep.subr.mxu0 0.0
    %313 = vmatpush1.msra.mxu0 0.0
    %314 = vmatprep.subr.mxu0 0.0
    %315 = vmatpush1.msra.mxu0 0.0
    %316 = vmatprep.subr.mxu0 0.0
    %317 = vmatpush1.msra.mxu0 0.0
    %318 = vmatprep.subr.mxu0 0.0
    %319 = vmatpush1.msra.mxu0 0.0
    %320 = vmatprep.subr.mxu0 0.0
    %321 = vmatpush1.msra.mxu0 0.0
    %322 = vmatprep.subr.mxu0 0.0
    %323 = vmatpush1.msra.mxu0 0.0
    %324 = vmatprep.subr.mxu0 0.0
    %325 = vmatpush1.msra.mxu0 0.0
    %326 = vmatprep.subr.mxu0 0.0
    %327 = vmatpush1.msra.mxu0 0.0
    %328 = vmatprep.subr.mxu0 0.0
    %329 = vmatpush1.msra.mxu0 0.0
    %330 = vmatprep.subr.mxu0 0.0
    %331 = vmatpush1.msra.mxu0 0.0
    %332 = vmatprep.subr.mxu0 0.0
    %333 = vmatpush1.msra.mxu0 0.0
    %334 = vmatprep.subr.mxu0 0.0
    %335 = vmatpush1.msra.mxu0 0.0
    %336 = vmatprep.subr.mxu0 0.0
    %337 = vmatpush1.msra.mxu0 0.0
    %338 = vmatprep.subr.mxu0 0.0
    %339 = vmatpush1.msra.mxu0 0.0
    %340 = vmatprep.subr.mxu0 0.0
    %341 = vmatpush1.msra.mxu0 0.0
    %342 = vmatprep.subr.mxu0 0.0
    %343 = vmatpush1.msra.mxu0 0.0
    %344 = vmatprep.subr.mxu0 0.0
    %345 = vmatpush1.msra.mxu0 0.0
    %346 = vmatprep.subr.mxu0 0.0
    %347 = vmatpush1.msra.mxu0 0.0
    %348 = vmatprep.subr.mxu0 0.0
    %349 = vmatpush1.msra.mxu0 0.0
    %350 = vmatprep.subr.mxu0 0.0
    %351 = vmatpush1.msra.mxu0 0.0
    %352 = vmatprep.subr.mxu0 0.0
    %353 = vmatpush1.msra.mxu0 0.0
    %354 = vmatprep.subr.mxu0 0.0
    %355 = vmatpush1.msra.mxu0 0.0
    %356 = vmatprep.subr.mxu0 0.0
    %357 = vmatpush1.msra.mxu0 0.0
    %358 = vmatprep.subr.mxu0 0.0
    %359 = vmatpush1.msra.mxu0 0.0
    %360 = vmatprep.subr.mxu0 0.0
    %361 = vmatpush1.msra.mxu0 0.0
    %362 = vmatprep.subr.mxu0 0.0
    %363 = vmatpush1.msra.mxu0 0.0
    %364 = vmatprep.subr.mxu0 0.0
    %365 = vmatpush1.msra.mxu0 0.0
    %366 = vmatprep.mubr.f32.mxu0 0.0
    %367 = vmatmul.mubr.f32.gmra.mrb[0].mxu0 %v229
    %v368 = vpop.f32.mrb[0].mxu0
    %v369 = vadd.f32 %v225, %v368
    %v370 = vpop.f32.mrb[0].mxu0
    %v371 = vadd.f32 %v225, %v370
    %372 = vdwg.mxu0
    %v373 = vmax.f32 %v298, 0.0
    %v374 = vmax.f32 %v300, 0.0
    %v375 = vmax.f32 %v369, 0.0
    %v376 = vmax.f32 %v371, 0.0
    %vm377 = vcmp.ge.s32.totalorder %v158, 1
    %vm378 = vcmp.ge.s32.totalorder %v159, 1
    %vm379 = vcmp.ge.s32.totalorder %v160, 1
    %vm380 = vcmp.ge.s32.totalorder %v161, 1
    %vm381 = vcmp.lt.s32.totalorder %v158, 15
    %vm382 = vcmp.lt.s32.totalorder %v159, 15
    %vm383 = vcmp.lt.s32.totalorder %v160, 15
    %vm384 = vcmp.lt.s32.totalorder %v161, 15
    %385 = vrot.lane.b32.xlu0 %v373, 1
    %v386 = vpop.permute.xlu0 %385
    %387 = vrot.lane.b32.xlu0 %v374, 1
    %v388 = vpop.permute.xlu0 %387
    %389 = vrot.lane.b32.xlu0 %v375, 1
    %v390 = vpop.permute.xlu0 %389
    %391 = vrot.lane.b32.xlu0 %v376, 1
    %v392 = vpop.permute.xlu0 %391
    %vm393 = vcmp.lt.s32.totalorder %v62, 1
    %v394 = vsel %vm393, %v390, %v392
    %v395 = vsel %vm393, %v388, %v390
    %v396 = vsel %vm393, %v386, %v388
    %v397 = vsel %vm393, %v392, %v386
    %v398 = vsel %vm377, 1, 0
    %v399 = vsel %vm378, 1, 0
    %v400 = vsel %vm379, 1, 0
    %v401 = vsel %vm380, 1, 0
    %vm402 = vcmp.eq.s32.totalorder %v398, 1
    %vm403 = vcmp.eq.s32.totalorder %v399, 1
    %vm404 = vcmp.eq.s32.totalorder %v400, 1
    %vm405 = vcmp.eq.s32.totalorder %v401, 1
    %v406 = vsel %vm402, %v397, 0.0
    %v407 = vsel %vm403, %v396, 0.0
    %v408 = vsel %vm404, %v395, 0.0
    %v409 = vsel %vm405, %v394, 0.0
    %410 = vrot.lane.b32.xlu0 %v373, 127
    %v411 = vpop.permute.xlu0 %410
    %412 = vrot.lane.b32.xlu0 %v374, 127
    %v413 = vpop.permute.xlu0 %412
    %414 = vrot.lane.b32.xlu0 %v375, 127
    %v415 = vpop.permute.xlu0 %414
    %416 = vrot.lane.b32.xlu0 %v376, 127
    %v417 = vpop.permute.xlu0 %416
    %vm418 = vcmp.lt.s32.totalorder %v62, 127
    %v419 = vsel %vm418, %v415, %v417
    %v420 = vsel %vm418, %v413, %v415
    %v421 = vsel %vm418, %v411, %v413
    %v422 = vsel %vm418, %v417, %v411
    %v423 = vsel %vm381, 1, 0
    %v424 = vsel %vm382, 1, 0
    %v425 = vsel %vm383, 1, 0
    %v426 = vsel %vm384, 1, 0
    %vm427 = vcmp.eq.s32.totalorder %v423, 1
    %vm428 = vcmp.eq.s32.totalorder %v424, 1
    %vm429 = vcmp.eq.s32.totalorder %v425, 1
    %vm430 = vcmp.eq.s32.totalorder %v426, 1
    %v431 = vsel %vm427, %v421, 0.0
    %v432 = vsel %vm428, %v420, 0.0
    %v433 = vsel %vm429, %v419, 0.0
    %v434 = vsel %vm430, %v422, 0.0
    %s435 = scalar_lea.vmem [#allocation5], 8
    %v436 = vld [vmem:[%s435] sm:$0xff]
    %s437 = scalar_lea.vmem [#allocation7], 8
    %v438 = vld [vmem:[%s437] sm:$0xff]
    %440 = vset.pattern.permute.xlu0 0
    %441 = vperm.xlu0 %440, %v438
    %v442 = vpop.permute.xlu0 %441
    %v445 = vsel %vm227, %v436, 0
    %447 = vmatprep.subr.mxu0 %v407
    %448 = vmatpush1.msra.mxu0 %v406
    %449 = vmatprep.subr.mxu0 %v374
    %450 = vmatpush1.msra.mxu0 %v373
    %451 = vmatprep.subr.mxu0 %v432
    %452 = vmatpush1.msra.mxu0 %v431
    %453 = vmatprep.subr.mxu0 0.0
    %454 = vmatpush1.msra.mxu0 0.0
    %455 = vmatprep.subr.mxu0 0.0
    %456 = vmatpush1.msra.mxu0 0.0
    %457 = vmatprep.subr.mxu0 0.0
    %458 = vmatpush1.msra.mxu0 0.0
    %459 = vmatprep.subr.mxu0 0.0
    %460 = vmatpush1.msra.mxu0 0.0
    %461 = vmatprep.subr.mxu0 0.0
    %462 = vmatpush1.msra.mxu0 0.0
    %463 = vmatprep.subr.mxu0 0.0
    %464 = vmatpush1.msra.mxu0 0.0
    %465 = vmatprep.subr.mxu0 0.0
    %466 = vmatpush1.msra.mxu0 0.0
    %467 = vmatprep.subr.mxu0 0.0
    %468 = vmatpush1.msra.mxu0 0.0
    %469 = vmatprep.subr.mxu0 0.0
    %470 = vmatpush1.msra.mxu0 0.0
    %471 = vmatprep.subr.mxu0 0.0
    %472 = vmatpush1.msra.mxu0 0.0
    %473 = vmatprep.subr.mxu0 0.0
    %474 = vmatpush1.msra.mxu0 0.0
    %475 = vmatprep.subr.mxu0 0.0
    %476 = vmatpush1.msra.mxu0 0.0
    %477 = vmatprep.subr.mxu0 0.0
    %478 = vmatpush1.msra.mxu0 0.0
    %479 = vmatprep.subr.mxu0 0.0
    %480 = vmatpush1.msra.mxu0 0.0
    %481 = vmatprep.subr.mxu0 0.0
    %482 = vmatpush1.msra.mxu0 0.0
    %483 = vmatprep.subr.mxu0 0.0
    %484 = vmatpush1.msra.mxu0 0.0
    %485 = vmatprep.subr.mxu0 0.0
    %486 = vmatpush1.msra.mxu0 0.0
    %487 = vmatprep.subr.mxu0 0.0
    %488 = vmatpush1.msra.mxu0 0.0
    %489 = vmatprep.subr.mxu0 0.0
    %490 = vmatpush1.msra.mxu0 0.0
    %491 = vmatprep.subr.mxu0 0.0
    %492 = vmatpush1.msra.mxu0 0.0
    %493 = vmatprep.subr.mxu0 0.0
    %494 = vmatpush1.msra.mxu0 0.0
    %495 = vmatprep.subr.mxu0 0.0
    %496 = vmatpush1.msra.mxu0 0.0
    %497 = vmatprep.subr.mxu0 0.0
    %498 = vmatpush1.msra.mxu0 0.0
    %499 = vmatprep.subr.mxu0 0.0
    %500 = vmatpush1.msra.mxu0 0.0
    %501 = vmatprep.subr.mxu0 0.0
    %502 = vmatpush1.msra.mxu0 0.0
    %503 = vmatprep.subr.mxu0 0.0
    %504 = vmatpush1.msra.mxu0 0.0
    %505 = vmatprep.subr.mxu0 0.0
    %506 = vmatpush1.msra.mxu0 0.0
    %507 = vmatprep.subr.mxu0 0.0
    %508 = vmatpush1.msra.mxu0 0.0
    %509 = vmatprep.subr.mxu0 0.0
    %510 = vmatpush1.msra.mxu0 0.0
    %511 = vmatprep.mubr.f32.mxu0 0.0
    %512 = vmatmul.mubr.f32.gmra.mrb[0].mxu0 %v445
    %v513 = vpop.f32.mrb[0].mxu0
    %v514 = vadd.f32 %v442, %v513
    %v515 = vpop.f32.mrb[0].mxu0
    %v516 = vadd.f32 %v442, %v515
    %517 = vdwg.mxu0
    %518 = vmatprep.subr.mxu0 %v409
    %519 = vmatpush1.msra.mxu0 %v408
    %520 = vmatprep.subr.mxu0 %v376
    %521 = vmatpush1.msra.mxu0 %v375
    %522 = vmatprep.subr.mxu0 %v434
    %523 = vmatpush1.msra.mxu0 %v433
    %524 = vmatprep.subr.mxu0 0.0
    %525 = vmatpush1.msra.mxu0 0.0
    %526 = vmatprep.subr.mxu0 0.0
    %527 = vmatpush1.msra.mxu0 0.0
    %528 = vmatprep.subr.mxu0 0.0
    %529 = vmatpush1.msra.mxu0 0.0
    %530 = vmatprep.subr.mxu0 0.0
    %531 = vmatpush1.msra.mxu0 0.0
    %532 = vmatprep.subr.mxu0 0.0
    %533 = vmatpush1.msra.mxu0 0.0
    %534 = vmatprep.subr.mxu0 0.0
    %535 = vmatpush1.msra.mxu0 0.0
    %536 = vmatprep.subr.mxu0 0.0
    %537 = vmatpush1.msra.mxu0 0.0
    %538 = vmatprep.subr.mxu0 0.0
    %539 = vmatpush1.msra.mxu0 0.0
    %540 = vmatprep.subr.mxu0 0.0
    %541 = vmatpush1.msra.mxu0 0.0
    %542 = vmatprep.subr.mxu0 0.0
    %543 = vmatpush1.msra.mxu0 0.0
    %544 = vmatprep.subr.mxu0 0.0
    %545 = vmatpush1.msra.mxu0 0.0
    %546 = vmatprep.subr.mxu0 0.0
    %547 = vmatpush1.msra.mxu0 0.0
    %548 = vmatprep.subr.mxu0 0.0
    %549 = vmatpush1.msra.mxu0 0.0
    %550 = vmatprep.subr.mxu0 0.0
    %551 = vmatpush1.msra.mxu0 0.0
    %552 = vmatprep.subr.mxu0 0.0
    %553 = vmatpush1.msra.mxu0 0.0
    %554 = vmatprep.subr.mxu0 0.0
    %555 = vmatpush1.msra.mxu0 0.0
    %556 = vmatprep.subr.mxu0 0.0
    %557 = vmatpush1.msra.mxu0 0.0
    %558 = vmatprep.subr.mxu0 0.0
    %559 = vmatpush1.msra.mxu0 0.0
    %560 = vmatprep.subr.mxu0 0.0
    %561 = vmatpush1.msra.mxu0 0.0
    %562 = vmatprep.subr.mxu0 0.0
    %563 = vmatpush1.msra.mxu0 0.0
    %564 = vmatprep.subr.mxu0 0.0
    %565 = vmatpush1.msra.mxu0 0.0
    %566 = vmatprep.subr.mxu0 0.0
    %567 = vmatpush1.msra.mxu0 0.0
    %568 = vmatprep.subr.mxu0 0.0
    %569 = vmatpush1.msra.mxu0 0.0
    %570 = vmatprep.subr.mxu0 0.0
    %571 = vmatpush1.msra.mxu0 0.0
    %572 = vmatprep.subr.mxu0 0.0
    %573 = vmatpush1.msra.mxu0 0.0
    %574 = vmatprep.subr.mxu0 0.0
    %575 = vmatpush1.msra.mxu0 0.0
    %576 = vmatprep.subr.mxu0 0.0
    %577 = vmatpush1.msra.mxu0 0.0
    %578 = vmatprep.subr.mxu0 0.0
    %579 = vmatpush1.msra.mxu0 0.0
    %580 = vmatprep.subr.mxu0 0.0
    %581 = vmatpush1.msra.mxu0 0.0
    %582 = vmatprep.mubr.f32.mxu0 0.0
    %583 = vmatmul.mubr.f32.gmra.mrb[0].mxu0 %v445
    %v584 = vpop.f32.mrb[0].mxu0
    %v585 = vadd.f32 %v442, %v584
    %v586 = vpop.f32.mrb[0].mxu0
    %v587 = vadd.f32 %v442, %v586
    %588 = vdwg.mxu0
    %v589 = vmax.f32 %v514, 0.0
    %v590 = vmax.f32 %v516, 0.0
    %v591 = vmax.f32 %v585, 0.0
    %v592 = vmax.f32 %v587, 0.0
    %vm593 = vcmp.ge.s32.totalorder %v110, 32
    %vm594 = vcmp.ge.s32.totalorder %v111, 32
    %vm595 = vcmp.ge.s32.totalorder %v112, 32
    %vm596 = vcmp.ge.s32.totalorder %v113, 32
    %vm597 = vcmp.lt.s32.totalorder %v110, 224
    %vm598 = vcmp.lt.s32.totalorder %v111, 224
    %vm599 = vcmp.lt.s32.totalorder %v112, 224
    %vm600 = vcmp.lt.s32.totalorder %v113, 224
    %601 = vrot.lane.b32.xlu0 %v589, 32
    %v602 = vpop.permute.xlu0 %601
    %603 = vrot.lane.b32.xlu0 %v590, 32
    %v604 = vpop.permute.xlu0 %603
    %605 = vrot.lane.b32.xlu0 %v591, 32
    %v606 = vpop.permute.xlu0 %605
    %607 = vrot.lane.b32.xlu0 %v592, 32
    %v608 = vpop.permute.xlu0 %607
    %vm609 = vcmp.lt.s32.totalorder %v62, 32
    %v610 = vsel %vm609, %v606, %v608
    %v611 = vsel %vm609, %v604, %v606
    %v612 = vsel %vm609, %v602, %v604
    %v613 = vsel %vm609, %v608, %v602
    %v614 = vsel %vm593, 1, 0
    %v615 = vsel %vm594, 1, 0
    %v616 = vsel %vm595, 1, 0
    %v617 = vsel %vm596, 1, 0
    %vm618 = vcmp.eq.s32.totalorder %v614, 1
    %vm619 = vcmp.eq.s32.totalorder %v615, 1
    %vm620 = vcmp.eq.s32.totalorder %v616, 1
    %vm621 = vcmp.eq.s32.totalorder %v617, 1
    %v622 = vsel %vm618, %v613, 0.0
    %v623 = vsel %vm619, %v612, 0.0
    %v624 = vsel %vm620, %v611, 0.0
    %v625 = vsel %vm621, %v610, 0.0
    %626 = vrot.lane.b32.xlu0 %v589, 96
    %v627 = vpop.permute.xlu0 %626
    %628 = vrot.lane.b32.xlu0 %v590, 96
    %v629 = vpop.permute.xlu0 %628
    %630 = vrot.lane.b32.xlu0 %v591, 96
    %v631 = vpop.permute.xlu0 %630
    %632 = vrot.lane.b32.xlu0 %v592, 96
    %v633 = vpop.permute.xlu0 %632
    %vm634 = vcmp.lt.s32.totalorder %v62, 96
    %v635 = vsel %vm634, %v631, %v633
    %v636 = vsel %vm634, %v629, %v631
    %v637 = vsel %vm634, %v627, %v629
    %v638 = vsel %vm634, %v633, %v627
    %v639 = vsel %vm597, 1, 0
    %v640 = vsel %vm598, 1, 0
    %v641 = vsel %vm599, 1, 0
    %v642 = vsel %vm600, 1, 0
    %vm643 = vcmp.eq.s32.totalorder %v639, 1
    %vm644 = vcmp.eq.s32.totalorder %v640, 1
    %vm645 = vcmp.eq.s32.totalorder %v641, 1
    %vm646 = vcmp.eq.s32.totalorder %v642, 1
    %v647 = vsel %vm643, %v637, 0.0
    %v648 = vsel %vm644, %v636, 0.0
    %v649 = vsel %vm645, %v635, 0.0
    %v650 = vsel %vm646, %v638, 0.0
    %s651 = scalar_lea.vmem [#allocation5], 16
    %v652 = vld [vmem:[%s651] sm:$0xff]
    %s653 = scalar_lea.vmem [#allocation7], 16
    %v654 = vld [vmem:[%s653] sm:$0xff]
    %656 = vset.pattern.permute.xlu0 0
    %657 = vperm.xlu0 %656, %v654
    %v658 = vpop.permute.xlu0 %657
    %v661 = vsel %vm227, %v652, 0
    %663 = vmatprep.subr.mxu0 %v623
    %664 = vmatpush1.msra.mxu0 %v622
    %665 = vmatprep.subr.mxu0 %v590
    %666 = vmatpush1.msra.mxu0 %v589
    %667 = vmatprep.subr.mxu0 %v648
    %668 = vmatpush1.msra.mxu0 %v647
    %669 = vmatprep.subr.mxu0 0.0
    %670 = vmatpush1.msra.mxu0 0.0
    %671 = vmatprep.subr.mxu0 0.0
    %672 = vmatpush1.msra.mxu0 0.0
    %673 = vmatprep.subr.mxu0 0.0
    %674 = vmatpush1.msra.mxu0 0.0
    %675 = vmatprep.subr.mxu0 0.0
    %676 = vmatpush1.msra.mxu0 0.0
    %677 = vmatprep.subr.mxu0 0.0
    %678 = vmatpush1.msra.mxu0 0.0
    %679 = vmatprep.subr.mxu0 0.0
    %680 = vmatpush1.msra.mxu0 0.0
    %681 = vmatprep.subr.mxu0 0.0
    %682 = vmatpush1.msra.mxu0 0.0
    %683 = vmatprep.subr.mxu0 0.0
    %684 = vmatpush1.msra.mxu0 0.0
    %685 = vmatprep.subr.mxu0 0.0
    %686 = vmatpush1.msra.mxu0 0.0
    %687 = vmatprep.subr.mxu0 0.0
    %688 = vmatpush1.msra.mxu0 0.0
    %689 = vmatprep.subr.mxu0 0.0
    %690 = vmatpush1.msra.mxu0 0.0
    %691 = vmatprep.subr.mxu0 0.0
    %692 = vmatpush1.msra.mxu0 0.0
    %693 = vmatprep.subr.mxu0 0.0
    %694 = vmatpush1.msra.mxu0 0.0
    %695 = vmatprep.subr.mxu0 0.0
    %696 = vmatpush1.msra.mxu0 0.0
    %697 = vmatprep.subr.mxu0 0.0
    %698 = vmatpush1.msra.mxu0 0.0
    %699 = vmatprep.subr.mxu0 0.0
    %700 = vmatpush1.msra.mxu0 0.0
    %701 = vmatprep.subr.mxu0 0.0
    %702 = vmatpush1.msra.mxu0 0.0
    %703 = vmatprep.subr.mxu0 0.0
    %704 = vmatpush1.msra.mxu0 0.0
    %705 = vmatprep.subr.mxu0 0.0
    %706 = vmatpush1.msra.mxu0 0.0
    %707 = vmatprep.subr.mxu0 0.0
    %708 = vmatpush1.msra.mxu0 0.0
    %709 = vmatprep.subr.mxu0 0.0
    %710 = vmatpush1.msra.mxu0 0.0
    %711 = vmatprep.subr.mxu0 0.0
    %712 = vmatpush1.msra.mxu0 0.0
    %713 = vmatprep.subr.mxu0 0.0
    %714 = vmatpush1.msra.mxu0 0.0
    %715 = vmatprep.subr.mxu0 0.0
    %716 = vmatpush1.msra.mxu0 0.0
    %717 = vmatprep.subr.mxu0 0.0
    %718 = vmatpush1.msra.mxu0 0.0
    %719 = vmatprep.subr.mxu0 0.0
    %720 = vmatpush1.msra.mxu0 0.0
    %721 = vmatprep.subr.mxu0 0.0
    %722 = vmatpush1.msra.mxu0 0.0
    %723 = vmatprep.subr.mxu0 0.0
    %724 = vmatpush1.msra.mxu0 0.0
    %725 = vmatprep.subr.mxu0 0.0
    %726 = vmatpush1.msra.mxu0 0.0
    %727 = vmatprep.mubr.f32.mxu0 0.0
    %728 = vmatmul.mubr.f32.gmra.mrb[0].mxu0 %v661
    %v729 = vpop.f32.mrb[0].mxu0
    %v730 = vadd.f32 %v658, %v729
    %v731 = vpop.f32.mrb[0].mxu0
    %v732 = vadd.f32 %v658, %v731
    %733 = vdwg.mxu0
    %734 = vmatprep.subr.mxu0 %v625
    %735 = vmatpush1.msra.mxu0 %v624
    %736 = vmatprep.subr.mxu0 %v592
    %737 = vmatpush1.msra.mxu0 %v591
    %738 = vmatprep.subr.mxu0 %v650
    %739 = vmatpush1.msra.mxu0 %v649
    %740 = vmatprep.subr.mxu0 0.0
    %741 = vmatpush1.msra.mxu0 0.0
    %742 = vmatprep.subr.mxu0 0.0
    %743 = vmatpush1.msra.mxu0 0.0
    %744 = vmatprep.subr.mxu0 0.0
    %745 = vmatpush1.msra.mxu0 0.0
    %746 = vmatprep.subr.mxu0 0.0
    %747 = vmatpush1.msra.mxu0 0.0
    %748 = vmatprep.subr.mxu0 0.0
    %749 = vmatpush1.msra.mxu0 0.0
    %750 = vmatprep.subr.mxu0 0.0
    %751 = vmatpush1.msra.mxu0 0.0
    %752 = vmatprep.subr.mxu0 0.0
    %753 = vmatpush1.msra.mxu0 0.0
    %754 = vmatprep.subr.mxu0 0.0
    %755 = vmatpush1.msra.mxu0 0.0
    %756 = vmatprep.subr.mxu0 0.0
    %757 = vmatpush1.msra.mxu0 0.0
    %758 = vmatprep.subr.mxu0 0.0
    %759 = vmatpush1.msra.mxu0 0.0
    %760 = vmatprep.subr.mxu0 0.0
    %761 = vmatpush1.msra.mxu0 0.0
    %762 = vmatprep.subr.mxu0 0.0
    %763 = vmatpush1.msra.mxu0 0.0
    %764 = vmatprep.subr.mxu0 0.0
    %765 = vmatpush1.msra.mxu0 0.0
    %766 = vmatprep.subr.mxu0 0.0
    %767 = vmatpush1.msra.mxu0 0.0
    %768 = vmatprep.subr.mxu0 0.0
    %769 = vmatpush1.msra.mxu0 0.0
    %770 = vmatprep.subr.mxu0 0.0
    %771 = vmatpush1.msra.mxu0 0.0
    %772 = vmatprep.subr.mxu0 0.0
    %773 = vmatpush1.msra.mxu0 0.0
    %774 = vmatprep.subr.mxu0 0.0
    %775 = vmatpush1.msra.mxu0 0.0
    %776 = vmatprep.subr.mxu0 0.0
    %777 = vmatpush1.msra.mxu0 0.0
    %778 = vmatprep.subr.mxu0 0.0
    %779 = vmatpush1.msra.mxu0 0.0
    %780 = vmatprep.subr.mxu0 0.0
    %781 = vmatpush1.msra.mxu0 0.0
    %782 = vmatprep.subr.mxu0 0.0
    %783 = vmatpush1.msra.mxu0 0.0
    %784 = vmatprep.subr.mxu0 0.0
    %785 = vmatpush1.msra.mxu0 0.0
    %786 = vmatprep.subr.mxu0 0.0
    %787 = vmatpush1.msra.mxu0 0.0
    %788 = vmatprep.subr.mxu0 0.0
    %789 = vmatpush1.msra.mxu0 0.0
    %790 = vmatprep.subr.mxu0 0.0
    %791 = vmatpush1.msra.mxu0 0.0
    %792 = vmatprep.subr.mxu0 0.0
    %793 = vmatpush1.msra.mxu0 0.0
    %794 = vmatprep.subr.mxu0 0.0
    %795 = vmatpush1.msra.mxu0 0.0
    %796 = vmatprep.subr.mxu0 0.0
    %797 = vmatpush1.msra.mxu0 0.0
    %798 = vmatprep.mubr.f32.mxu0 0.0
    %799 = vmatmul.mubr.f32.gmra.mrb[0].mxu0 %v661
    %v800 = vpop.f32.mrb[0].mxu0
    %v801 = vadd.f32 %v658, %v800
    %v802 = vpop.f32.mrb[0].mxu0
    %v803 = vadd.f32 %v658, %v802
    %804 = vdwg.mxu0
    %v805 = vmax.f32 %v730, 0.0
    %v806 = vmax.f32 %v732, 0.0
    %v807 = vmax.f32 %v801, 0.0
    %v808 = vmax.f32 %v803, 0.0
    %vm809 = vcmp.ge.s32.totalorder %v158, 2
    %vm810 = vcmp.ge.s32.totalorder %v159, 2
    %vm811 = vcmp.ge.s32.totalorder %v160, 2
    %vm812 = vcmp.ge.s32.totalorder %v161, 2
    %vm813 = vcmp.lt.s32.totalorder %v158, 14
    %vm814 = vcmp.lt.s32.totalorder %v159, 14
    %vm815 = vcmp.lt.s32.totalorder %v160, 14
    %vm816 = vcmp.lt.s32.totalorder %v161, 14
    %817 = vrot.lane.b32.xlu0 %v805, 2
    %v818 = vpop.permute.xlu0 %817
    %819 = vrot.lane.b32.xlu0 %v806, 2
    %v820 = vpop.permute.xlu0 %819
    %821 = vrot.lane.b32.xlu0 %v807, 2
    %v822 = vpop.permute.xlu0 %821
    %823 = vrot.lane.b32.xlu0 %v808, 2
    %v824 = vpop.permute.xlu0 %823
    %vm825 = vcmp.lt.s32.totalorder %v62, 2
    %v826 = vsel %vm825, %v822, %v824
    %v827 = vsel %vm825, %v820, %v822
    %v828 = vsel %vm825, %v818, %v820
    %v829 = vsel %vm825, %v824, %v818
    %v830 = vsel %vm809, 1, 0
    %v831 = vsel %vm810, 1, 0
    %v832 = vsel %vm811, 1, 0
    %v833 = vsel %vm812, 1, 0
    %vm834 = vcmp.eq.s32.totalorder %v830, 1
    %vm835 = vcmp.eq.s32.totalorder %v831, 1
    %vm836 = vcmp.eq.s32.totalorder %v832, 1
    %vm837 = vcmp.eq.s32.totalorder %v833, 1
    %v838 = vsel %vm834, %v829, 0.0
    %v839 = vsel %vm835, %v828, 0.0
    %v840 = vsel %vm836, %v827, 0.0
    %v841 = vsel %vm837, %v826, 0.0
    %842 = vrot.lane.b32.xlu0 %v805, 126
    %v843 = vpop.permute.xlu0 %842
    %844 = vrot.lane.b32.xlu0 %v806, 126
    %v845 = vpop.permute.xlu0 %844
    %846 = vrot.lane.b32.xlu0 %v807, 126
    %v847 = vpop.permute.xlu0 %846
    %848 = vrot.lane.b32.xlu0 %v808, 126
    %v849 = vpop.permute.xlu0 %848
    %vm850 = vcmp.lt.s32.totalorder %v62, 126
    %v851 = vsel %vm850, %v847, %v849
    %v852 = vsel %vm850, %v845, %v847
    %v853 = vsel %vm850, %v843, %v845
    %v854 = vsel %vm850, %v849, %v843
    %v855 = vsel %vm813, 1, 0
    %v856 = vsel %vm814, 1, 0
    %v857 = vsel %vm815, 1, 0
    %v858 = vsel %vm816, 1, 0
    %vm859 = vcmp.eq.s32.totalorder %v855, 1
    %vm860 = vcmp.eq.s32.totalorder %v856, 1
    %vm861 = vcmp.eq.s32.totalorder %v857, 1
    %vm862 = vcmp.eq.s32.totalorder %v858, 1
    %v863 = vsel %vm859, %v853, 0.0
    %v864 = vsel %vm860, %v852, 0.0
    %v865 = vsel %vm861, %v851, 0.0
    %v866 = vsel %vm862, %v854, 0.0
    %s867 = scalar_lea.vmem [#allocation5], 24
    %v868 = vld [vmem:[%s867] sm:$0xff]
    %s869 = scalar_lea.vmem [#allocation7], 24
    %v870 = vld [vmem:[%s869] sm:$0xff]
    %872 = vset.pattern.permute.xlu0 0
    %873 = vperm.xlu0 %872, %v870
    %v874 = vpop.permute.xlu0 %873
    %v877 = vsel %vm227, %v868, 0
    %879 = vmatprep.subr.mxu0 %v839
    %880 = vmatpush1.msra.mxu0 %v838
    %881 = vmatprep.subr.mxu0 %v806
    %882 = vmatpush1.msra.mxu0 %v805
    %883 = vmatprep.subr.mxu0 %v864
    %884 = vmatpush1.msra.mxu0 %v863
    %885 = vmatprep.subr.mxu0 0.0
    %886 = vmatpush1.msra.mxu0 0.0
    %887 = vmatprep.subr.mxu0 0.0
    %888 = vmatpush1.msra.mxu0 0.0
    %889 = vmatprep.subr.mxu0 0.0
    %890 = vmatpush1.msra.mxu0 0.0
    %891 = vmatprep.subr.mxu0 0.0
    %892 = vmatpush1.msra.mxu0 0.0
    %893 = vmatprep.subr.mxu0 0.0
    %894 = vmatpush1.msra.mxu0 0.0
    %895 = vmatprep.subr.mxu0 0.0
    %896 = vmatpush1.msra.mxu0 0.0
    %897 = vmatprep.subr.mxu0 0.0
    %898 = vmatpush1.msra.mxu0 0.0
    %899 = vmatprep.subr.mxu0 0.0
    %900 = vmatpush1.msra.mxu0 0.0
    %901 = vmatprep.subr.mxu0 0.0
    %902 = vmatpush1.msra.mxu0 0.0
    %903 = vmatprep.subr.mxu0 0.0
    %904 = vmatpush1.msra.mxu0 0.0
    %905 = vmatprep.subr.mxu0 0.0
    %906 = vmatpush1.msra.mxu0 0.0
    %907 = vmatprep.subr.mxu0 0.0
    %908 = vmatpush1.msra.mxu0 0.0
    %909 = vmatprep.subr.mxu0 0.0
    %910 = vmatpush1.msra.mxu0 0.0
    %911 = vmatprep.subr.mxu0 0.0
    %912 = vmatpush1.msra.mxu0 0.0
    %913 = vmatprep.subr.mxu0 0.0
    %914 = vmatpush1.msra.mxu0 0.0
    %915 = vmatprep.subr.mxu0 0.0
    %916 = vmatpush1.msra.mxu0 0.0
    %917 = vmatprep.subr.mxu0 0.0
    %918 = vmatpush1.msra.mxu0 0.0
    %919 = vmatprep.subr.mxu0 0.0
    %920 = vmatpush1.msra.mxu0 0.0
    %921 = vmatprep.subr.mxu0 0.0
    %922 = vmatpush1.msra.mxu0 0.0
    %923 = vmatprep.subr.mxu0 0.0
    %924 = vmatpush1.msra.mxu0 0.0
    %925 = vmatprep.subr.mxu0 0.0
    %926 = vmatpush1.msra.mxu0 0.0
    %927 = vmatprep.subr.mxu0 0.0
    %928 = vmatpush1.msra.mxu0 0.0
    %929 = vmatprep.subr.mxu0 0.0
    %930 = vmatpush1.msra.mxu0 0.0
    %931 = vmatprep.subr.mxu0 0.0
    %932 = vmatpush1.msra.mxu0 0.0
    %933 = vmatprep.subr.mxu0 0.0
    %934 = vmatpush1.msra.mxu0 0.0
    %935 = vmatprep.subr.mxu0 0.0
    %936 = vmatpush1.msra.mxu0 0.0
    %937 = vmatprep.subr.mxu0 0.0
    %938 = vmatpush1.msra.mxu0 0.0
    %939 = vmatprep.subr.mxu0 0.0
    %940 = vmatpush1.msra.mxu0 0.0
    %941 = vmatprep.subr.mxu0 0.0
    %942 = vmatpush1.msra.mxu0 0.0
    %943 = vmatprep.mubr.f32.mxu0 0.0
    %944 = vmatmul.mubr.f32.gmra.mrb[0].mxu0 %v877
    %v945 = vpop.f32.mrb[0].mxu0
    %v946 = vadd.f32 %v874, %v945
    %v947 = vpop.f32.mrb[0].mxu0
    %v948 = vadd.f32 %v874, %v947
    %949 = vdwg.mxu0
    %950 = vmatprep.subr.mxu0 %v841
    %951 = vmatpush1.msra.mxu0 %v840
    %952 = vmatprep.subr.mxu0 %v808
    %953 = vmatpush1.msra.mxu0 %v807
    %954 = vmatprep.subr.mxu0 %v866
    %955 = vmatpush1.msra.mxu0 %v865
    %956 = vmatprep.subr.mxu0 0.0
    %957 = vmatpush1.msra.mxu0 0.0
    %958 = vmatprep.subr.mxu0 0.0
    %959 = vmatpush1.msra.mxu0 0.0
    %960 = vmatprep.subr.mxu0 0.0
    %961 = vmatpush1.msra.mxu0 0.0
    %962 = vmatprep.subr.mxu0 0.0
    %963 = vmatpush1.msra.mxu0 0.0
    %964 = vmatprep.subr.mxu0 0.0
    %965 = vmatpush1.msra.mxu0 0.0
    %966 = vmatprep.subr.mxu0 0.0
    %967 = vmatpush1.msra.mxu0 0.0
    %968 = vmatprep.subr.mxu0 0.0
    %969 = vmatpush1.msra.mxu0 0.0
    %970 = vmatprep.subr.mxu0 0.0
    %971 = vmatpush1.msra.mxu0 0.0
    %972 = vmatprep.subr.mxu0 0.0
    %973 = vmatpush1.msra.mxu0 0.0
    %974 = vmatprep.subr.mxu0 0.0
    %975 = vmatpush1.msra.mxu0 0.0
    %976 = vmatprep.subr.mxu0 0.0
    %977 = vmatpush1.msra.mxu0 0.0
    %978 = vmatprep.subr.mxu0 0.0
    %979 = vmatpush1.msra.mxu0 0.0
    %980 = vmatprep.subr.mxu0 0.0
    %981 = vmatpush1.msra.mxu0 0.0
    %982 = vmatprep.subr.mxu0 0.0
    %983 = vmatpush1.msra.mxu0 0.0
    %984 = vmatprep.subr.mxu0 0.0
    %985 = vmatpush1.msra.mxu0 0.0
    %986 = vmatprep.subr.mxu0 0.0
    %987 = vmatpush1.msra.mxu0 0.0
    %988 = vmatprep.subr.mxu0 0.0
    %989 = vmatpush1.msra.mxu0 0.0
    %990 = vmatprep.subr.mxu0 0.0
    %991 = vmatpush1.msra.mxu0 0.0
    %992 = vmatprep.subr.mxu0 0.0
    %993 = vmatpush1.msra.mxu0 0.0
    %994 = vmatprep.subr.mxu0 0.0
    %995 = vmatpush1.msra.mxu0 0.0
    %996 = vmatprep.subr.mxu0 0.0
    %997 = vmatpush1.msra.mxu0 0.0
    %998 = vmatprep.subr.mxu0 0.0
    %999 = vmatpush1.msra.mxu0 0.0
    %1000 = vmatprep.subr.mxu0 0.0
    %1001 = vmatpush1.msra.mxu0 0.0
    %1002 = vmatprep.subr.mxu0 0.0
    %1003 = vmatpush1.msra.mxu0 0.0
    %1004 = vmatprep.subr.mxu0 0.0
    %1005 = vmatpush1.msra.mxu0 0.0
    %1006 = vmatprep.subr.mxu0 0.0
    %1007 = vmatpush1.msra.mxu0 0.0
    %1008 = vmatprep.subr.mxu0 0.0
    %1009 = vmatpush1.msra.mxu0 0.0
    %1010 = vmatprep.subr.mxu0 0.0
    %1011 = vmatpush1.msra.mxu0 0.0
    %1012 = vmatprep.subr.mxu0 0.0
    %1013 = vmatpush1.msra.mxu0 0.0
    %1014 = vmatprep.mubr.f32.mxu0 0.0
    %1015 = vmatmul.mubr.f32.gmra.mrb[0].mxu0 %v877
    %v1016 = vpop.f32.mrb[0].mxu0
    %v1017 = vadd.f32 %v874, %v1016
    %v1018 = vpop.f32.mrb[0].mxu0
    %v1019 = vadd.f32 %v874, %v1018
    %1020 = vdwg.mxu0
    %1021 = vst [vmem:[#allocation9] sm:$0xff] %v946
    %1022 = vst [vmem:[#allocation9 + $0x8] sm:$0xff] %v948
    %1023 = vst [vmem:[#allocation9 + $0x10] sm:$0xff] %v1017
    %1024 = vst [vmem:[#allocation9 + $0x18] sm:$0xff] %v1019
    %v1025 = vadd.f32 %v946, %v57
    %v1026 = vadd.f32 %v948, %v58
    %v1027 = vadd.f32 %v1017, %v59
    %v1028 = vadd.f32 %v1019, %v60
    %v1029 = vmax.f32 %v1025, 0.0
    %v1030 = vmax.f32 %v1026, 0.0
    %v1031 = vmax.f32 %v1027, 0.0
    %v1032 = vmax.f32 %v1028, 0.0
    %1033 = vst [vmem:[#allocation8] sm:$0xff] %v1029
    %1034 = vst [vmem:[#allocation8 + $0x8] sm:$0xff] %v1030
    %1035 = vst [vmem:[#allocation8 + $0x10] sm:$0xff] %v1031
    %1036 = vst [vmem:[#allocation8 + $0x18] sm:$0xff] %v1032
    // Predicated region
    $region26: #{tpu_custom_call.1} parent=1 // pred_check
      _
    $region27: #{tpu_custom_call.1} parent=1 // pred_check_branch
      %1038 = sbr.rel (0) target = $region29
    $region28: #{tpu_custom_call.1} parent=1 // pred_region
      %s1040 = ssub.s32 512, 512
      %1041 = vsyncadd [#allocation4], %s1040
      %s1043 = sshll.u32 [#allocation8], 4
      %s1044 = int_to_ptr.vmem [resolvable:$true] %s1043
      %1046 = dma.vmem_to_hbm [thread:$0]  %s1044, 512, %s3, [#allocation4]
    $region29: #{tpu_custom_call.1} parent=1 // pred_fallthru
      _
    // Predicated region
    $region30: #{tpu_custom_call.1} parent=1 // pred_check
      _
    $region31: #{tpu_custom_call.1} parent=1 // pred_check_branch
      %1048 = sbr.rel (0) target = $region33
    $region32: #{tpu_custom_call.1} parent=1 // pred_region
      %s1050 = ssub.s32 512, 512
      %1051 = vsyncadd [#allocation10], %s1050
      %s1053 = sshll.u32 [#allocation9], 4
      %s1054 = int_to_ptr.vmem [resolvable:$true] %s1053
      %1056 = dma.vmem_to_hbm [thread:$0]  %s1054, 512, %s4, [#allocation10]
    $region33: #{tpu_custom_call.1} parent=1 // pred_fallthru
      _
    // Predicated region
    $region34: #{tpu_custom_call.1} parent=1 // pred_check
      _
    $region35: #{tpu_custom_call.1} parent=1 // pred_check_branch
      %1058 = sbr.rel (0) target = $region37
    $region36: #{tpu_custom_call.1} parent=1 // pred_region
      %1059 = dma.done [#allocation4], 512
    $region37: #{tpu_custom_call.1} parent=1 // pred_fallthru
      _
    // Predicated region
    $region38: #{tpu_custom_call.1} parent=1 // pred_check
      _
    $region39: #{tpu_custom_call.1} parent=1 // pred_check_branch
      %1061 = sbr.rel (0) target = $region41
    $region40: #{tpu_custom_call.1} parent=1 // pred_region
      %1062 = dma.done [#allocation10], 512
    $region41: #{tpu_custom_call.1} parent=1 // pred_fallthru
      _
    %1063 = vsyncpa [#allocation3], 1
    %1064 = vsyncpa [#allocation6], 1
    %1065 = vsyncpa [#allocation4], 1
    %1066 = vsyncpa [#allocation10], 1

</llo_original>
